<compile_context>
chip_gen: v7x
topology: tpu7x:2x2x1
jax: 0.10.0
libtpu: 0.0.40
codegen_flags: <defaults>
</compile_context>

<pallas_src>
import jax
import jax.numpy as jnp
from jax import lax
from jax.experimental import pallas as pl
from jax.experimental.pallas import tpu as pltpu

D_IN, D_H1, D_H2, D_OUT = 347, 75, 10, 1
H1P, H2P = 128, 128          # lane-padded hidden dims
EPS = 1e-5


def _round_up(n, m):
    return ((n + m - 1) // m) * m


def _tensorcores_per_chip():
    """2 on v7x, else 1.  Best-effort; falling back to 1 is only a perf choice."""
    try:
        dk = jax.devices()[0].device_kind.lower()
    except Exception:
        return 1
    return 2 if ("v7" in dk or "tpu7" in dk) else 1


def _select_batch_tile(B, tb_max):
    n_tc = _tensorcores_per_chip()
    if B >= tb_max * n_tc:
        return tb_max                                   # big B: max tile
    if n_tc > 1 and B > 256:
        # v7x only: force >=2 grid steps so the 'parallel' batch axis
        # shards across both TensorCores (lane-dense multiple of 128).
        return _round_up(pl.cdiv(B, n_tc), 128)
    # small/medium B on 1-TC parts: a single tile, rounded for bf16 packing.
    return min(_round_up(B, 16), tb_max)


def mlp_kernel(x_ref, w1_ref, b1_ref, w2_ref, b2_ref, w3_ref, b3_ref, o_ref):
    # x arrives as f32 from HBM; cast to bf16 on the VPU (free slack) so the
    # dominant HBM stream is read exactly once, in its native dtype.
    x = x_ref[...].astype(jnp.bfloat16)                          # (tb, 347)

    # Layer 1: Linear (+ folded BN) + ReLU.  Dropout == identity in eval.
    h = jnp.dot(x, w1_ref[...], preferred_element_type=jnp.float32) + b1_ref[...]
    h = jnp.maximum(h, 0.0)                                      # (tb, 128) f32

    # Layer 2: Linear (+ folded BN) + ReLU.
    h = jnp.dot(h.astype(jnp.bfloat16), w2_ref[...],
                preferred_element_type=jnp.float32) + b2_ref[...]
    h = jnp.maximum(h, 0.0)                                      # (tb, 128) f32

    # Layer 3: (10 -> 1) linear.  Contract the lane axis of (1,128) x (tb,128)
    # so the result is a lane-dense (1, tb) row -- no masked column stores.
    o = lax.dot_general(w3_ref[...], h, (((1,), (1,)), ((), ())),
                        preferred_element_type=jnp.float32) + b3_ref[...]
    o_ref[...] = o.astype(o_ref.dtype)                           # (1, tb)


def prepare_params(params):
    """One-time model-load prep: fold BN into weights/biases, zero-pad hidden
    dims to 128 lanes, cast matmul weights to bf16.  NOT per-call."""
    (w1, b1, g1, be1, rm1, rv1,
     w2, b2, g2, be2, rm2, rv2,
     w3, b3) = params

    s1 = g1 / jnp.sqrt(rv1 + EPS)
    s2 = g2 / jnp.sqrt(rv2 + EPS)

    w1f = w1 * s1[None, :]                       # (347, 75)
    b1f = (b1 - rm1) * s1 + be1                  # (75,)
    w2f = w2 * s2[None, :]                       # (75, 10)
    b2f = (b2 - rm2) * s2 + be2                  # (10,)

    w1p = jnp.zeros((D_IN, H1P), jnp.float32).at[:, :D_H1].set(w1f)
    b1p = jnp.zeros((1, H1P), jnp.float32).at[:, :D_H1].set(b1f[None, :])
    w2p = jnp.zeros((H1P, H2P), jnp.float32).at[:D_H1, :D_H2].set(w2f)
    b2p = jnp.zeros((1, H2P), jnp.float32).at[:, :D_H2].set(b2f[None, :])
    w3p = jnp.zeros((1, H2P), jnp.float32).at[:, :D_H2].set(w3[:, 0][None, :])
    b3p = b3.reshape(1, 1).astype(jnp.float32)

    return (w1p.astype(jnp.bfloat16), b1p,
            w2p.astype(jnp.bfloat16), b2p,
            w3p, b3p)


def mlp_forward(x, prepared, *, tb_max=1024):
    """x: (B, 347) float32, prepared = prepare_params(params) -> (B, 1) f32."""
    B = x.shape[0]
    w1p, b1p, w2p, b2p, w3p, b3p = prepared

    tb = _select_batch_tile(B, tb_max)
    ntiles = pl.cdiv(B, tb)

    full = lambda shape: pl.BlockSpec(shape, lambda i: (0, 0))

    flops = 2 * B * (D_IN * D_H1 + D_H1 * D_H2 + D_H2 * D_OUT)
    bytes_accessed = (B * D_IN * 4 + B * D_OUT * 4
                      + (D_IN * H1P + H1P * H2P) * 2
                      + (H1P + H2P + H2P + 1) * 4)

    out = pl.pallas_call(
        mlp_kernel,
        out_shape=jax.ShapeDtypeStruct((1, ntiles * tb), jnp.float32),
        grid=(ntiles,),
        in_specs=[
            pl.BlockSpec((tb, D_IN), lambda i: (i, 0)),   # x tile over batch
            full((D_IN, H1P)), full((1, H1P)),
            full((H1P, H2P)), full((1, H2P)),
            full((1, H2P)), full((1, 1)),
        ],
        out_specs=pl.BlockSpec((1, tb), lambda i: (0, i)),  # lane-dense row
        compiler_params=pltpu.CompilerParams(
            dimension_semantics=("parallel",)),
        cost_estimate=pl.CostEstimate(flops=flops, transcendentals=0,
                                      bytes_accessed=bytes_accessed),
    )(x, w1p, b1p, w2p, b2p, w3p, b3p)

    # Un-pad / un-transpose the lane-dense row back to the module's (B, 1).
    return out[0, :B].reshape(B, D_OUT)


def init_params(key):
    """Deterministic init. Linear weights stored as (in, out) == torch W.T."""
    ks = jax.random.split(key, 6)

    def linear(kw, kb, fan_in, fan_out):
        bound = 1.0 / jnp.sqrt(fan_in)
        w = jax.random.uniform(kw, (fan_in, fan_out), jnp.float32, -bound, bound)
        b = jax.random.uniform(kb, (fan_out,), jnp.float32, -bound, bound)
        return w, b

    w1, b1 = linear(ks[0], ks[1], D_IN, D_H1)
    w2, b2 = linear(ks[2], ks[3], D_H1, D_H2)
    w3, b3 = linear(ks[4], ks[5], D_H2, D_OUT)

    # BatchNorm1d defaults: gamma=1, beta=0, running_mean=0, running_var=1
    g1, be1 = jnp.ones((D_H1,), jnp.float32), jnp.zeros((D_H1,), jnp.float32)
    rm1, rv1 = jnp.zeros((D_H1,), jnp.float32), jnp.ones((D_H1,), jnp.float32)
    g2, be2 = jnp.ones((D_H2,), jnp.float32), jnp.zeros((D_H2,), jnp.float32)
    rm2, rv2 = jnp.zeros((D_H2,), jnp.float32), jnp.ones((D_H2,), jnp.float32)

    return (w1, b1, g1, be1, rm1, rv1,
            w2, b2, g2, be2, rm2, rv2,
            w3, b3)


def mlp_reference(x, params):
    (w1, b1, g1, be1, rm1, rv1,
     w2, b2, g2, be2, rm2, rv2,
     w3, b3) = params
    h = x @ w1 + b1
    h = (h - rm1) / jnp.sqrt(rv1 + EPS) * g1 + be1
    h = jnp.maximum(h, 0.0)
    h = h @ w2 + b2
    h = (h - rm2) / jnp.sqrt(rv2 + EPS) * g2 + be2
    h = jnp.maximum(h, 0.0)
    return h @ w3 + b3


if __name__ == "__main__":
    key = jax.random.PRNGKey(0)
    k_x, k_p = jax.random.split(key)

    B = 16
    x = jax.random.normal(k_x, (B, D_IN), jnp.float32)
    params = init_params(k_p)

    prepared = prepare_params(params)          # model-load time, not per call
    out = mlp_forward(x, prepared)
    out = jax.block_until_ready(out)

    ref = mlp_reference(x, params)
    assert out.shape == (B, D_OUT)
    # bf16 matmul inputs (f32 accumulation) -> loosened tolerance vs f32 ref.
    assert jnp.allclose(out, ref, atol=2e-2, rtol=2e-2)

    print("KERNEL_OK")
</pallas_src>

<mosaic_0001>
module attributes {stable_mosaic.version = 11 : i64} {
  func.func @mlp_kernel(%arg0: i32, %arg1: memref<16x347xf32, #tpu.memory_space<vmem>>, %arg2: memref<347x128xbf16, #tpu.memory_space<vmem>>, %arg3: memref<1x128xf32, #tpu.memory_space<vmem>>, %arg4: memref<128x128xbf16, #tpu.memory_space<vmem>>, %arg5: memref<1x128xf32, #tpu.memory_space<vmem>>, %arg6: memref<1x128xf32, #tpu.memory_space<vmem>>, %arg7: memref<1x1xf32, #tpu.memory_space<vmem>>, %arg8: memref<1x16xf32, #tpu.memory_space<vmem>>) attributes {dimension_semantics = [#tpu.dimension_semantics<parallel>], iteration_bounds = array<i64: 1>, scalar_prefetch = 0 : i64, scratch_operands = 0 : i64, tpu.core_type = #tpu.core_type<tc>, window_params = [{transform_indices = @transform_0, window_bounds = array<i64: 16, 347>}, {pipeline_mode = #tpu.pipeline_mode<synchronous>, transform_indices = @transform_1, window_bounds = array<i64: 347, 128>}, {pipeline_mode = #tpu.pipeline_mode<synchronous>, transform_indices = @transform_2, window_bounds = array<i64: 1, 128>}, {pipeline_mode = #tpu.pipeline_mode<synchronous>, transform_indices = @transform_3, window_bounds = array<i64: 128, 128>}, {pipeline_mode = #tpu.pipeline_mode<synchronous>, transform_indices = @transform_4, window_bounds = array<i64: 1, 128>}, {pipeline_mode = #tpu.pipeline_mode<synchronous>, transform_indices = @transform_5, window_bounds = array<i64: 1, 128>}, {pipeline_mode = #tpu.pipeline_mode<synchronous>, transform_indices = @transform_6, window_bounds = array<i64: 1, 1>}, {transform_indices = @transform_7, window_bounds = array<i64: 1, 16>}]} {
    %c0 = arith.constant 0 : index
    %c0_0 = arith.constant 0 : index
    %0 = vector.load %arg1[%c0, %c0_0] : memref<16x347xf32, #tpu.memory_space<vmem>>, vector<16x347xf32>
    %1 = arith.truncf %0 : vector<16x347xf32> to vector<16x347xbf16>
    %c0_1 = arith.constant 0 : index
    %c0_2 = arith.constant 0 : index
    %2 = vector.load %arg2[%c0_1, %c0_2] : memref<347x128xbf16, #tpu.memory_space<vmem>>, vector<347x128xbf16>
    %cst = arith.constant dense<0.000000e+00> : vector<16x128xf32>
    %3 = tpu.matmul %1, %2, %cst {dimension_numbers = #tpu.dot_dimension_numbers<[1], [0], [0], [1], [0, 0, 1, 1], [], []>} : vector<16x347xbf16>, vector<347x128xbf16>, vector<16x128xf32> -> vector<16x128xf32>
    %c0_3 = arith.constant 0 : index
    %c0_4 = arith.constant 0 : index
    %4 = vector.load %arg3[%c0_3, %c0_4] : memref<1x128xf32, #tpu.memory_space<vmem>>, vector<1x128xf32>
    %5 = vector.broadcast %4 : vector<1x128xf32> to vector<16x128xf32>
    %6 = arith.addf %3, %5 : vector<16x128xf32>
    %cst_5 = arith.constant 0.000000e+00 : f32
    %7 = vector.broadcast %cst_5 : f32 to vector<16x128xf32>
    %8 = arith.maximumf %6, %7 : vector<16x128xf32>
    %9 = arith.truncf %8 : vector<16x128xf32> to vector<16x128xbf16>
    %c0_6 = arith.constant 0 : index
    %c0_7 = arith.constant 0 : index
    %10 = vector.load %arg4[%c0_6, %c0_7] : memref<128x128xbf16, #tpu.memory_space<vmem>>, vector<128x128xbf16>
    %cst_8 = arith.constant dense<0.000000e+00> : vector<16x128xf32>
    %11 = tpu.matmul %9, %10, %cst_8 {dimension_numbers = #tpu.dot_dimension_numbers<[1], [0], [0], [1], [0, 0, 1, 1], [], []>} : vector<16x128xbf16>, vector<128x128xbf16>, vector<16x128xf32> -> vector<16x128xf32>
    %c0_9 = arith.constant 0 : index
    %c0_10 = arith.constant 0 : index
    %12 = vector.load %arg5[%c0_9, %c0_10] : memref<1x128xf32, #tpu.memory_space<vmem>>, vector<1x128xf32>
    %13 = vector.broadcast %12 : vector<1x128xf32> to vector<16x128xf32>
    %14 = arith.addf %11, %13 : vector<16x128xf32>
    %cst_11 = arith.constant 0.000000e+00 : f32
    %15 = vector.broadcast %cst_11 : f32 to vector<16x128xf32>
    %16 = arith.maximumf %14, %15 : vector<16x128xf32>
    %c0_12 = arith.constant 0 : index
    %c0_13 = arith.constant 0 : index
    %17 = vector.load %arg6[%c0_12, %c0_13] : memref<1x128xf32, #tpu.memory_space<vmem>>, vector<1x128xf32>
    %cst_14 = arith.constant dense<0.000000e+00> : vector<1x16xf32>
    %18 = tpu.matmul %17, %16, %cst_14 {dimension_numbers = #tpu.dot_dimension_numbers<[1], [1], [0], [0], [0, 0, 1, 0], [], []>} : vector<1x128xf32>, vector<16x128xf32>, vector<1x16xf32> -> vector<1x16xf32>
    %c0_15 = arith.constant 0 : index
    %c0_16 = arith.constant 0 : index
    %19 = vector.load %arg7[%c0_15, %c0_16] : memref<1x1xf32, #tpu.memory_space<vmem>>, vector<1x1xf32>
    %20 = vector.broadcast %19 : vector<1x1xf32> to vector<1x16xf32>
    %21 = arith.addf %18, %20 : vector<1x16xf32>
    %c0_17 = arith.constant 0 : index
    %c0_18 = arith.constant 0 : index
    %22 = vector.load %arg8[%c0_17, %c0_18] : memref<1x16xf32, #tpu.memory_space<vmem>>, vector<1x16xf32>
    tpu.vector_store %arg8[%c0_17, %c0_18], %21 {strides = array<i32>} : memref<1x16xf32, #tpu.memory_space<vmem>>, vector<1x16xf32>,
    return
  }
  func.func @transform_0(%arg0: i32) -> (i32, i32) {
    %c0_i32 = arith.constant 0 : i32
    %c0_i32_0 = arith.constant 0 : i32
    return %arg0, %c0_i32 : i32, i32
  }
  func.func @transform_1(%arg0: i32) -> (i32, i32) {
    %c0_i32 = arith.constant 0 : i32
    %c0_i32_0 = arith.constant 0 : i32
    %c0_i32_1 = arith.constant 0 : i32
    return %c0_i32, %c0_i32_0 : i32, i32
  }
  func.func @transform_2(%arg0: i32) -> (i32, i32) {
    %c0_i32 = arith.constant 0 : i32
    %c0_i32_0 = arith.constant 0 : i32
    %c0_i32_1 = arith.constant 0 : i32
    return %c0_i32, %c0_i32_0 : i32, i32
  }
  func.func @transform_3(%arg0: i32) -> (i32, i32) {
    %c0_i32 = arith.constant 0 : i32
    %c0_i32_0 = arith.constant 0 : i32
    %c0_i32_1 = arith.constant 0 : i32
    return %c0_i32, %c0_i32_0 : i32, i32
  }
  func.func @transform_4(%arg0: i32) -> (i32, i32) {
    %c0_i32 = arith.constant 0 : i32
    %c0_i32_0 = arith.constant 0 : i32
    %c0_i32_1 = arith.constant 0 : i32
    return %c0_i32, %c0_i32_0 : i32, i32
  }
  func.func @transform_5(%arg0: i32) -> (i32, i32) {
    %c0_i32 = arith.constant 0 : i32
    %c0_i32_0 = arith.constant 0 : i32
    %c0_i32_1 = arith.constant 0 : i32
    return %c0_i32, %c0_i32_0 : i32, i32
  }
  func.func @transform_6(%arg0: i32) -> (i32, i32) {
    %c0_i32 = arith.constant 0 : i32
    %c0_i32_0 = arith.constant 0 : i32
    %c0_i32_1 = arith.constant 0 : i32
    return %c0_i32, %c0_i32_0 : i32, i32
  }
  func.func @transform_7(%arg0: i32) -> (i32, i32) {
    %c0_i32 = arith.constant 0 : i32
    %c0_i32_0 = arith.constant 0 : i32
    return %c0_i32, %arg0 : i32, i32
  }
}

</mosaic_0001>

<llo_original>
// kernel: tpu_custom_call.1
$region0: #{tpu_custom_call.1}
  #allocation0 [shape = 'u32[]', space=smem, size = 0x4, offset = 0x4, fixed_abs, tag = 'smem constant byte address 0x4 - core index']
  #allocation1 [shape = 'u32[144,128]{1,0:T(1,128)}', space=vmem, size = 0x12000, scoped, tag = 'internal scratch']
  #allocation2 [shape = 'f32[1,1]{1,0:T(1,128)S(1)}', space=vmem, size = 0x200, scoped, tag = 'scoped memory for tpu_custom_call.1']
  %s0 = inlined_call_operand.hbm [shape: f32[16,347], index: 0, kind: input, shape index: {}]
  %s1 = inlined_call_operand.hbm [shape: bf16[347,128], index: 1, kind: input, shape index: {}]
  %s2 = inlined_call_operand.vmem [shape: f32[1,128], index: 2, kind: input, shape index: {}]
  %s3 = inlined_call_operand.hbm [shape: bf16[128,128], index: 3, kind: input, shape index: {}]
  %s4 = inlined_call_operand.vmem [shape: f32[1,128], index: 4, kind: input, shape index: {}]
  %s5 = inlined_call_operand.vmem [shape: f32[1,128], index: 5, kind: input, shape index: {}]
  %s6 = inlined_call_operand.<no memory space> [shape: f32[1,1], index: 6, kind: input, shape index: {}]
  %s7 = inlined_call_operand.hbm [shape: f32[1,16], index: 7, kind: output, shape index: {}]
  %s8 = sld [smem:[#allocation0]]
  $region50: #{tpu_custom_call.1} parent=0
    _
  %s10 = ssub.s32 1, %s8
  %s11 = scalar_select 0, %s10, %s8
  %v12 = vstv %s6
  %13 = vst [vmem:[#allocation2] sm:$0x1] %v12
  $region1: #{tpu_custom_call.1} parent=0
    #allocation3 [shape = 'u8[24576]{0}', space=vmem, size = 0x6000, scoped, tag = 'input window, operand 0, single buffered']
    #allocation4 [shape = 's32[1]{0}', space=sflag, size = 0x4, scoped, tag = 'scoped memory for tpu_custom_call.1']
    #allocation5 [shape = 's32[1]{0}', space=sflag, size = 0x4, scoped, tag = 'scoped memory for tpu_custom_call.1']
    #allocation6 [shape = 'u8[90112]{0}', space=vmem, size = 0x16000, scoped, tag = 'input window, operand 1, single buffered']
    #allocation7 [shape = 's32[1]{0}', space=sflag, size = 0x4, scoped, tag = 'scoped memory for tpu_custom_call.1']
    #allocation8 [shape = 'u8[32768]{0}', space=vmem, size = 0x8000, scoped, tag = 'input window, operand 3, single buffered']
    #allocation9 [shape = 'u8[512]{0}', space=vmem, size = 0x400, scoped, tag = 'output window, operand 0, single buffered']
    %14 = vsyncpa [#allocation4], 0
    %15 = vsyncpa [#allocation7], 0
    %16 = vsyncpa [#allocation5], 0
    // Predicated region
    $region2: #{tpu_custom_call.1} parent=1 // pred_check
      _
    $region3: #{tpu_custom_call.1} parent=1 // pred_check_branch
      %18 = sbr.rel (0) target = $region5
    $region4: #{tpu_custom_call.1} parent=1 // pred_region
      %s20 = ssub.s32 768, 768
      %21 = vsyncadd [#allocation4], %s20
      %s22 = sshll.u32 [#allocation3], 4
      %s23 = int_to_ptr.vmem [resolvable:$true] %s22
      %28 = dma.hbm_to_vmem [thread:$0]  %s0, 768, %s23, [#allocation4], 384, 384, 24
    $region5: #{tpu_custom_call.1} parent=1 // pred_fallthru
      _
    // Predicated region
    $region6: #{tpu_custom_call.1} parent=1 // pred_check
      _
    $region7: #{tpu_custom_call.1} parent=1 // pred_check_branch
      %30 = sbr.rel (0) target = $region9
    $region8: #{tpu_custom_call.1} parent=1 // pred_region
      %s32 = ssub.s32 2816, 2816
      %33 = vsyncadd [#allocation7], %s32
      %s34 = sshll.u32 [#allocation6], 4
      %s35 = int_to_ptr.vmem [resolvable:$true] %s34
      %40 = dma.hbm_to_vmem [thread:$0]  %s1, 2816, %s35, [#allocation7], 64, 64, 4
    $region9: #{tpu_custom_call.1} parent=1 // pred_fallthru
      _
    // Predicated region
    $region10: #{tpu_custom_call.1} parent=1 // pred_check
      _
    $region11: #{tpu_custom_call.1} parent=1 // pred_check_branch
      %42 = sbr.rel (0) target = $region13
    $region12: #{tpu_custom_call.1} parent=1 // pred_region
      _
    $region13: #{tpu_custom_call.1} parent=1 // pred_fallthru
      _
    // Predicated region
    $region14: #{tpu_custom_call.1} parent=1 // pred_check
      _
    $region15: #{tpu_custom_call.1} parent=1 // pred_check_branch
      %44 = sbr.rel (0) target = $region17
    $region16: #{tpu_custom_call.1} parent=1 // pred_region
      %s46 = ssub.s32 1024, 1024
      %47 = vsyncadd [#allocation7], %s46
      %s48 = sshll.u32 [#allocation8], 4
      %s49 = int_to_ptr.vmem [resolvable:$true] %s48
      %54 = dma.hbm_to_vmem [thread:$0]  %s3, 1024, %s49, [#allocation7], 64, 64, 4
    $region17: #{tpu_custom_call.1} parent=1 // pred_fallthru
      _
    // Predicated region
    $region18: #{tpu_custom_call.1} parent=1 // pred_check
      _
    $region19: #{tpu_custom_call.1} parent=1 // pred_check_branch
      %56 = sbr.rel (0) target = $region21
    $region20: #{tpu_custom_call.1} parent=1 // pred_region
      _
    $region21: #{tpu_custom_call.1} parent=1 // pred_fallthru
      _
    // Predicated region
    $region22: #{tpu_custom_call.1} parent=1 // pred_check
      _
    $region23: #{tpu_custom_call.1} parent=1 // pred_check_branch
      %58 = sbr.rel (0) target = $region25
    $region24: #{tpu_custom_call.1} parent=1 // pred_region
      _
    $region25: #{tpu_custom_call.1} parent=1 // pred_fallthru
      _
    // Predicated region
    $region26: #{tpu_custom_call.1} parent=1 // pred_check
      _
    $region27: #{tpu_custom_call.1} parent=1 // pred_check_branch
      %60 = sbr.rel (0) target = $region29
    $region28: #{tpu_custom_call.1} parent=1 // pred_region
      _
    $region29: #{tpu_custom_call.1} parent=1 // pred_fallthru
      _
    // Predicated region
    $region30: #{tpu_custom_call.1} parent=1 // pred_check
      _
    $region31: #{tpu_custom_call.1} parent=1 // pred_check_branch
      %62 = sbr.rel (0) target = $region33
    $region32: #{tpu_custom_call.1} parent=1 // pred_region
      %63 = dma.done [#allocation4], 768
    $region33: #{tpu_custom_call.1} parent=1 // pred_fallthru
      _
    // Predicated region
    $region34: #{tpu_custom_call.1} parent=1 // pred_check
      _
    $region35: #{tpu_custom_call.1} parent=1 // pred_check_branch
      %65 = sbr.rel (0) target = $region37
    $region36: #{tpu_custom_call.1} parent=1 // pred_region
      %66 = dma.done [#allocation7], 2816
    $region37: #{tpu_custom_call.1} parent=1 // pred_fallthru
      _
    // Predicated region
    $region38: #{tpu_custom_call.1} parent=1 // pred_check
      _
    $region39: #{tpu_custom_call.1} parent=1 // pred_check_branch
      %68 = sbr.rel (0) target = $region41
    $region40: #{tpu_custom_call.1} parent=1 // pred_region
      %69 = dma.done [#allocation7], 1024
    $region41: #{tpu_custom_call.1} parent=1 // pred_fallthru
      _
    %v71 = vld [vmem:[#allocation3] sm:$0xff]
    %v72 = vld [vmem:[#allocation3 + $0x8] sm:$0xff]
    %v73 = vld [vmem:[#allocation3 + $0x10] sm:$0xff]
    %v74 = vld [vmem:[#allocation3 + $0x18] sm:$0xff]
    %v75 = vld [vmem:[#allocation3 + $0x20] sm:$0xff]
    %v76 = vld [vmem:[#allocation3 + $0x28] sm:$0xff]
    %v77 = vpack.c.bf16 %v74, %v71
    %v78 = vpack.c.bf16 %v75, %v72
    %v79 = vpack.c.bf16 %v76, %v73
    %v80 = vld [vmem:[#allocation6] sm:$0xf]
    %v81 = vld [vmem:[#allocation6 + $0x4] sm:$0xf]
    %v82 = vld [vmem:[#allocation6 + $0x8] sm:$0xf]
    %v83 = vld [vmem:[#allocation6 + $0xc] sm:$0xf]
    %v84 = vld [vmem:[#allocation6 + $0x10] sm:$0xf]
    %v85 = vld [vmem:[#allocation6 + $0x14] sm:$0xf]
    %v86 = vld [vmem:[#allocation6 + $0x18] sm:$0xf]
    %v87 = vld [vmem:[#allocation6 + $0x1c] sm:$0xf]
    %v88 = vld [vmem:[#allocation6 + $0x20] sm:$0xf]
    %v89 = vld [vmem:[#allocation6 + $0x24] sm:$0xf]
    %v90 = vld [vmem:[#allocation6 + $0x28] sm:$0xf]
    %v91 = vld [vmem:[#allocation6 + $0x2c] sm:$0xf]
    %v92 = vld [vmem:[#allocation6 + $0x30] sm:$0xf]
    %v93 = vld [vmem:[#allocation6 + $0x34] sm:$0xf]
    %v94 = vld [vmem:[#allocation6 + $0x38] sm:$0xf]
    %v95 = vld [vmem:[#allocation6 + $0x3c] sm:$0xf]
    %v96 = vld [vmem:[#allocation6 + $0x40] sm:$0xf]
    %v97 = vld [vmem:[#allocation6 + $0x44] sm:$0xf]
    %v98 = vld [vmem:[#allocation6 + $0x48] sm:$0xf]
    %v99 = vld [vmem:[#allocation6 + $0x4c] sm:$0xf]
    %v100 = vld [vmem:[#allocation6 + $0x50] sm:$0xf]
    %v101 = vld [vmem:[#allocation6 + $0x54] sm:$0xf]
    %v102 = vld [vmem:[#allocation6 + $0x58] sm:$0xf]
    %v103 = vld [vmem:[#allocation6 + $0x5c] sm:$0xf]
    %v104 = vld [vmem:[#allocation6 + $0x60] sm:$0xf]
    %v105 = vld [vmem:[#allocation6 + $0x64] sm:$0xf]
    %v106 = vld [vmem:[#allocation6 + $0x68] sm:$0xf]
    %v107 = vld [vmem:[#allocation6 + $0x6c] sm:$0xf]
    %v108 = vld [vmem:[#allocation6 + $0x70] sm:$0xf]
    %v109 = vld [vmem:[#allocation6 + $0x74] sm:$0xf]
    %v110 = vld [vmem:[#allocation6 + $0x78] sm:$0xf]
    %v111 = vld [vmem:[#allocation6 + $0x7c] sm:$0xf]
    %v112 = vld [vmem:[#allocation6 + $0x80] sm:$0xf]
    %v113 = vld [vmem:[#allocation6 + $0x84] sm:$0xf]
    %v114 = vld [vmem:[#allocation6 + $0x88] sm:$0xf]
    %v115 = vld [vmem:[#allocation6 + $0x8c] sm:$0xf]
    %v116 = vld [vmem:[#allocation6 + $0x90] sm:$0xf]
    %v117 = vld [vmem:[#allocation6 + $0x94] sm:$0xf]
    %v118 = vld [vmem:[#allocation6 + $0x98] sm:$0xf]
    %v119 = vld [vmem:[#allocation6 + $0x9c] sm:$0xf]
    %v120 = vld [vmem:[#allocation6 + $0xa0] sm:$0xf]
    %v121 = vld [vmem:[#allocation6 + $0xa4] sm:$0xf]
    %v122 = vld [vmem:[#allocation6 + $0xa8] sm:$0xf]
    %v123 = vld [vmem:[#allocation6 + $0xac] sm:$0x3]
    %v124 = vld [vmem:[%s2] sm:$0x1]
    %v126 = vlaneseq
    %v127 = vshrl.u32 %v126, 7
    %v128 = vsub.s32 0, %v127
    %v129 = vrot.slane %v124, %v128
    %v175 = vunpack.c.l.b16 %v80
    %v176 = vunpack.c.l.b16 %v81
    %v177 = vunpack.c.l.b16 %v82
    %v178 = vunpack.c.l.b16 %v83
    %v179 = vunpack.c.l.b16 %v84
    %v180 = vunpack.c.l.b16 %v85
    %v181 = vunpack.c.l.b16 %v86
    %v182 = vunpack.c.l.b16 %v87
    %v183 = vunpack.c.l.b16 %v88
    %v184 = vunpack.c.l.b16 %v89
    %v185 = vunpack.c.l.b16 %v90
    %v186 = vunpack.c.l.b16 %v91
    %v187 = vunpack.c.l.b16 %v92
    %v188 = vunpack.c.l.b16 %v93
    %v189 = vunpack.c.l.b16 %v94
    %v190 = vunpack.c.l.b16 %v95
    %v191 = vunpack.c.l.b16 %v96
    %v192 = vunpack.c.l.b16 %v97
    %v193 = vunpack.c.l.b16 %v98
    %v194 = vunpack.c.l.b16 %v99
    %v195 = vunpack.c.l.b16 %v100
    %v196 = vunpack.c.l.b16 %v101
    %v197 = vunpack.c.l.b16 %v102
    %v198 = vunpack.c.l.b16 %v103
    %v199 = vunpack.c.l.b16 %v104
    %v200 = vunpack.c.l.b16 %v105
    %v201 = vunpack.c.l.b16 %v106
    %v202 = vunpack.c.l.b16 %v107
    %v203 = vunpack.c.l.b16 %v108
    %v204 = vunpack.c.l.b16 %v109
    %v205 = vunpack.c.l.b16 %v110
    %v206 = vunpack.c.l.b16 %v111
    %v207 = vunpack.c.l.b16 %v112
    %v208 = vunpack.c.l.b16 %v113
    %v209 = vunpack.c.l.b16 %v114
    %v210 = vunpack.c.l.b16 %v115
    %v211 = vunpack.c.l.b16 %v116
    %v212 = vunpack.c.l.b16 %v117
    %v213 = vunpack.c.l.b16 %v118
    %v214 = vunpack.c.l.b16 %v119
    %v215 = vunpack.c.l.b16 %v120
    %v216 = vunpack.c.l.b16 %v121
    %v217 = vunpack.c.l.b16 %v122
    %v218 = vunpack.c.l.b16 %v123
    %v219 = vpack.c.b16 %v176, %v175
    %v220 = vpack.c.b16 %v178, %v177
    %v221 = vpack.c.b16 %v180, %v179
    %v222 = vpack.c.b16 %v182, %v181
    %v223 = vpack.c.b16 %v184, %v183
    %v224 = vpack.c.b16 %v186, %v185
    %v225 = vpack.c.b16 %v188, %v187
    %v226 = vpack.c.b16 %v190, %v189
    %v227 = vpack.c.b16 %v192, %v191
    %v228 = vpack.c.b16 %v194, %v193
    %v229 = vpack.c.b16 %v196, %v195
    %v230 = vpack.c.b16 %v198, %v197
    %v231 = vpack.c.b16 %v200, %v199
    %v232 = vpack.c.b16 %v202, %v201
    %v233 = vpack.c.b16 %v204, %v203
    %v234 = vpack.c.b16 %v206, %v205
    %v235 = vpack.c.b16 %v208, %v207
    %v236 = vpack.c.b16 %v210, %v209
    %v237 = vpack.c.b16 %v212, %v211
    %v238 = vpack.c.b16 %v214, %v213
    %v239 = vpack.c.b16 %v216, %v215
    %v240 = vpack.c.b16 %v218, %v217
    %vm262 = vcmask 744448
    %v264 = vsel %vm262, %v79, 0
    %vm266 = vcmask 1044480
    %vm267 = vcmask 1045504
    %v268 = vsel %vm266, 4294967295, 65535
    %v269 = vsel %vm267, %v268, 0
    %v271 = vand.u32 %v240, %v269
    %273 = vmatprep.subr.bf16.mxu0 0
    %274 = vmatpush1.bf16.msra.mxu0 %v219
    %275 = vmatprep.subr.bf16.mxu0 0
    %276 = vmatpush1.bf16.msra.mxu0 %v220
    %277 = vmatprep.subr.bf16.mxu0 0
    %278 = vmatpush1.bf16.msra.mxu0 %v221
    %279 = vmatprep.subr.bf16.mxu0 0
    %280 = vmatpush1.bf16.msra.mxu0 %v222
    %281 = vmatprep.subr.bf16.mxu0 0
    %282 = vmatpush1.bf16.msra.mxu0 %v223
    %283 = vmatprep.subr.bf16.mxu0 0
    %284 = vmatpush1.bf16.msra.mxu0 %v224
    %285 = vmatprep.subr.bf16.mxu0 0
    %286 = vmatpush1.bf16.msra.mxu0 %v225
    %287 = vmatprep.subr.bf16.mxu0 0
    %288 = vmatpush1.bf16.msra.mxu0 %v226
    %289 = vmatprep.subr.bf16.mxu0 0
    %290 = vmatpush1.bf16.msra.mxu0 %v227
    %291 = vmatprep.subr.bf16.mxu0 0
    %292 = vmatpush1.bf16.msra.mxu0 %v228
    %293 = vmatprep.subr.bf16.mxu0 0
    %294 = vmatpush1.bf16.msra.mxu0 %v229
    %295 = vmatprep.subr.bf16.mxu0 0
    %296 = vmatpush1.bf16.msra.mxu0 %v230
    %297 = vmatprep.subr.bf16.mxu0 0
    %298 = vmatpush1.bf16.msra.mxu0 %v231
    %299 = vmatprep.subr.bf16.mxu0 0
    %300 = vmatpush1.bf16.msra.mxu0 %v232
    %301 = vmatprep.subr.bf16.mxu0 0
    %302 = vmatpush1.bf16.msra.mxu0 %v233
    %303 = vmatprep.subr.bf16.mxu0 0
    %304 = vmatpush1.bf16.msra.mxu0 %v234
    %305 = vmatprep.mubr.bf16.mxu0 %v78
    %306 = vmatmul.mubr.bf16.gmra.mrb[0].mxu0 %v77
    %v307 = vpop.f32.mrb[0].mxu0
    %v308 = vadd.f32 %v129, %v307
    %v309 = vpop.f32.mrb[0].mxu0
    %v310 = vpop.f32.mrb[0].mxu0
    %v311 = vadd.f32 %v129, %v310
    %v312 = vpop.f32.mrb[0].mxu0
    %313 = vdwg.mxu0
    %314 = vmatprep.subr.bf16.mxu0 0
    %315 = vmatpush1.bf16.msra.mxu0 %v235
    %316 = vmatprep.subr.bf16.mxu0 0
    %317 = vmatpush1.bf16.msra.mxu0 %v236
    %318 = vmatprep.subr.bf16.mxu0 0
    %319 = vmatpush1.bf16.msra.mxu0 %v237
    %320 = vmatprep.subr.bf16.mxu0 0
    %321 = vmatpush1.bf16.msra.mxu0 %v238
    %322 = vmatprep.subr.bf16.mxu0 0
    %323 = vmatpush1.bf16.msra.mxu0 %v239
    %324 = vmatprep.subr.bf16.mxu0 0
    %325 = vmatpush1.bf16.msra.mxu0 %v271
    %326 = vmatprep.subr.bf16.mxu0 0
    %327 = vmatpush1.bf16.msra.mxu0 0
    %328 = vmatprep.subr.bf16.mxu0 0
    %329 = vmatpush1.bf16.msra.mxu0 0
    %330 = vmatprep.subr.bf16.mxu0 0
    %331 = vmatpush1.bf16.msra.mxu0 0
    %332 = vmatprep.subr.bf16.mxu0 0
    %333 = vmatpush1.bf16.msra.mxu0 0
    %334 = vmatprep.subr.bf16.mxu0 0
    %335 = vmatpush1.bf16.msra.mxu0 0
    %336 = vmatprep.subr.bf16.mxu0 0
    %337 = vmatpush1.bf16.msra.mxu0 0
    %338 = vmatprep.subr.bf16.mxu0 0
    %339 = vmatpush1.bf16.msra.mxu0 0
    %340 = vmatprep.subr.bf16.mxu0 0
    %341 = vmatpush1.bf16.msra.mxu0 0
    %342 = vmatprep.subr.bf16.mxu0 0
    %343 = vmatpush1.bf16.msra.mxu0 0
    %344 = vmatprep.subr.bf16.mxu0 0
    %345 = vmatpush1.bf16.msra.mxu0 0
    %346 = vmatprep.mubr.bf16.mxu0 0
    %347 = vmatmul.mubr.bf16.gmra.mrb[0].mxu0 %v264
    %v348 = vpop.f32.mrb[0].mxu0
    %v349 = vadd.f32 %v308, %v348
    %v350 = vpop.f32.mrb[0].mxu0
    %v351 = vpop.f32.mrb[0].mxu0
    %v352 = vadd.f32 %v311, %v351
    %v353 = vpop.f32.mrb[0].mxu0
    %354 = vdwg.mxu0
    %v355 = vmax.f32 %v349, 0.0
    %v356 = vmax.f32 %v352, 0.0
    %v357 = vpack.c.bf16 %v356, %v355
    %v358 = vld [vmem:[#allocation8] sm:$0xf]
    %v359 = vld [vmem:[#allocation8 + $0x4] sm:$0xf]
    %v360 = vld [vmem:[#allocation8 + $0x8] sm:$0xf]
    %v361 = vld [vmem:[#allocation8 + $0xc] sm:$0xf]
    %v362 = vld [vmem:[#allocation8 + $0x10] sm:$0xf]
    %v363 = vld [vmem:[#allocation8 + $0x14] sm:$0xf]
    %v364 = vld [vmem:[#allocation8 + $0x18] sm:$0xf]
    %v365 = vld [vmem:[#allocation8 + $0x1c] sm:$0xf]
    %v366 = vld [vmem:[#allocation8 + $0x20] sm:$0xf]
    %v367 = vld [vmem:[#allocation8 + $0x24] sm:$0xf]
    %v368 = vld [vmem:[#allocation8 + $0x28] sm:$0xf]
    %v369 = vld [vmem:[#allocation8 + $0x2c] sm:$0xf]
    %v370 = vld [vmem:[#allocation8 + $0x30] sm:$0xf]
    %v371 = vld [vmem:[#allocation8 + $0x34] sm:$0xf]
    %v372 = vld [vmem:[#allocation8 + $0x38] sm:$0xf]
    %v373 = vld [vmem:[#allocation8 + $0x3c] sm:$0xf]
    %v374 = vld [vmem:[%s4] sm:$0x1]
    %v376 = vlaneseq
    %v377 = vshrl.u32 %v376, 7
    %v378 = vsub.s32 0, %v377
    %v379 = vrot.slane %v374, %v378
    %v397 = vunpack.c.l.b16 %v358
    %v398 = vunpack.c.l.b16 %v359
    %v399 = vunpack.c.l.b16 %v360
    %v400 = vunpack.c.l.b16 %v361
    %v401 = vunpack.c.l.b16 %v362
    %v402 = vunpack.c.l.b16 %v363
    %v403 = vunpack.c.l.b16 %v364
    %v404 = vunpack.c.l.b16 %v365
    %v405 = vunpack.c.l.b16 %v366
    %v406 = vunpack.c.l.b16 %v367
    %v407 = vunpack.c.l.b16 %v368
    %v408 = vunpack.c.l.b16 %v369
    %v409 = vunpack.c.l.b16 %v370
    %v410 = vunpack.c.l.b16 %v371
    %v411 = vunpack.c.l.b16 %v372
    %v412 = vunpack.c.l.b16 %v373
    %v413 = vpack.c.b16 %v398, %v397
    %v414 = vpack.c.b16 %v400, %v399
    %v415 = vpack.c.b16 %v402, %v401
    %v416 = vpack.c.b16 %v404, %v403
    %v417 = vpack.c.b16 %v406, %v405
    %v418 = vpack.c.b16 %v408, %v407
    %v419 = vpack.c.b16 %v410, %v409
    %v420 = vpack.c.b16 %v412, %v411
    %429 = vmatprep.subr.bf16.mxu0 0
    %430 = vmatpush1.bf16.msra.mxu0 %v413
    %431 = vmatprep.subr.bf16.mxu0 0
    %432 = vmatpush1.bf16.msra.mxu0 %v414
    %433 = vmatprep.subr.bf16.mxu0 0
    %434 = vmatpush1.bf16.msra.mxu0 %v415
    %435 = vmatprep.subr.bf16.mxu0 0
    %436 = vmatpush1.bf16.msra.mxu0 %v416
    %437 = vmatprep.subr.bf16.mxu0 0
    %438 = vmatpush1.bf16.msra.mxu0 %v417
    %439 = vmatprep.subr.bf16.mxu0 0
    %440 = vmatpush1.bf16.msra.mxu0 %v418
    %441 = vmatprep.subr.bf16.mxu0 0
    %442 = vmatpush1.bf16.msra.mxu0 %v419
    %443 = vmatprep.subr.bf16.mxu0 0
    %444 = vmatpush1.bf16.msra.mxu0 %v420
    %445 = vmatprep.subr.bf16.mxu0 0
    %446 = vmatpush1.bf16.msra.mxu0 0
    %447 = vmatprep.subr.bf16.mxu0 0
    %448 = vmatpush1.bf16.msra.mxu0 0
    %449 = vmatprep.subr.bf16.mxu0 0
    %450 = vmatpush1.bf16.msra.mxu0 0
    %451 = vmatprep.subr.bf16.mxu0 0
    %452 = vmatpush1.bf16.msra.mxu0 0
    %453 = vmatprep.subr.bf16.mxu0 0
    %454 = vmatpush1.bf16.msra.mxu0 0
    %455 = vmatprep.subr.bf16.mxu0 0
    %456 = vmatpush1.bf16.msra.mxu0 0
    %457 = vmatprep.subr.bf16.mxu0 0
    %458 = vmatpush1.bf16.msra.mxu0 0
    %459 = vmatprep.subr.bf16.mxu0 0
    %460 = vmatpush1.bf16.msra.mxu0 0
    %461 = vmatprep.mubr.bf16.mxu0 0
    %462 = vmatmul.mubr.bf16.gmra.mrb[0].mxu0 %v357
    %v463 = vpop.f32.mrb[0].mxu0
    %v464 = vadd.f32 %v379, %v463
    %v465 = vpop.f32.mrb[0].mxu0
    %v466 = vpop.f32.mrb[0].mxu0
    %v467 = vadd.f32 %v379, %v466
    %v468 = vpop.f32.mrb[0].mxu0
    %469 = vdwg.mxu0
    %v470 = vmax.f32 %v464, 0.0
    %v471 = vmax.f32 %v467, 0.0
    %v472 = vld [vmem:[%s5] sm:$0x1]
    %v473 = vld [vmem:[#allocation2] sm:$0x1]
    %475 = vset.pattern.permute.xlu0 0
    %476 = vperm.xlu0 %475, %v473
    %v477 = vpop.permute.xlu0 %476
    %v479 = vlaneseq
    %v480 = vshrl.u32 %v479, 7
    %v481 = vsub.s32 0, %v480
    %v482 = vrot.slane %v477, %v481
    %483 = vmatprep.subr.mxu0 0.0
    %484 = vmatpush1.xpose.msra.mxu0 %v470
    %485 = vmatprep.subr.mxu0 0.0
    %486 = vmatpush1.xpose.msra.mxu0 %v471
    %487 = vmatprep.subr.mxu0 0.0
    %488 = vmatpush1.xpose.msra.mxu0 0.0
    %489 = vmatprep.subr.mxu0 0.0
    %490 = vmatpush1.xpose.msra.mxu0 0.0
    %491 = vmatprep.subr.mxu0 0.0
    %492 = vmatpush1.xpose.msra.mxu0 0.0
    %493 = vmatprep.subr.mxu0 0.0
    %494 = vmatpush1.xpose.msra.mxu0 0.0
    %495 = vmatprep.subr.mxu0 0.0
    %496 = vmatpush1.xpose.msra.mxu0 0.0
    %497 = vmatprep.subr.mxu0 0.0
    %498 = vmatpush1.xpose.msra.mxu0 0.0
    %499 = vmatprep.subr.mxu0 0.0
    %500 = vmatpush1.xpose.msra.mxu0 0.0
    %501 = vmatprep.subr.mxu0 0.0
    %502 = vmatpush1.xpose.msra.mxu0 0.0
    %503 = vmatprep.subr.mxu0 0.0
    %504 = vmatpush1.xpose.msra.mxu0 0.0
    %505 = vmatprep.subr.mxu0 0.0
    %506 = vmatpush1.xpose.msra.mxu0 0.0
    %507 = vmatprep.subr.mxu0 0.0
    %508 = vmatpush1.xpose.msra.mxu0 0.0
    %509 = vmatprep.subr.mxu0 0.0
    %510 = vmatpush1.xpose.msra.mxu0 0.0
    %511 = vmatprep.subr.mxu0 0.0
    %512 = vmatpush1.xpose.msra.mxu0 0.0
    %513 = vmatprep.subr.mxu0 0.0
    %514 = vmatpush1.xpose.msra.mxu0 0.0
    %515 = vmatprep.subr.mxu0 0.0
    %516 = vmatpush1.xpose.msra.mxu0 0.0
    %517 = vmatprep.subr.mxu0 0.0
    %518 = vmatpush1.xpose.msra.mxu0 0.0
    %519 = vmatprep.subr.mxu0 0.0
    %520 = vmatpush1.xpose.msra.mxu0 0.0
    %521 = vmatprep.subr.mxu0 0.0
    %522 = vmatpush1.xpose.msra.mxu0 0.0
    %523 = vmatprep.subr.mxu0 0.0
    %524 = vmatpush1.xpose.msra.mxu0 0.0
    %525 = vmatprep.subr.mxu0 0.0
    %526 = vmatpush1.xpose.msra.mxu0 0.0
    %527 = vmatprep.subr.mxu0 0.0
    %528 = vmatpush1.xpose.msra.mxu0 0.0
    %529 = vmatprep.subr.mxu0 0.0
    %530 = vmatpush1.xpose.msra.mxu0 0.0
    %531 = vmatprep.subr.mxu0 0.0
    %532 = vmatpush1.xpose.msra.mxu0 0.0
    %533 = vmatprep.subr.mxu0 0.0
    %534 = vmatpush1.xpose.msra.mxu0 0.0
    %535 = vmatprep.subr.mxu0 0.0
    %536 = vmatpush1.xpose.msra.mxu0 0.0
    %537 = vmatprep.subr.mxu0 0.0
    %538 = vmatpush1.xpose.msra.mxu0 0.0
    %539 = vmatprep.subr.mxu0 0.0
    %540 = vmatpush1.xpose.msra.mxu0 0.0
    %541 = vmatprep.subr.mxu0 0.0
    %542 = vmatpush1.xpose.msra.mxu0 0.0
    %543 = vmatprep.subr.mxu0 0.0
    %544 = vmatpush1.xpose.msra.mxu0 0.0
    %545 = vmatprep.subr.mxu0 0.0
    %546 = vmatpush1.xpose.msra.mxu0 0.0
    %547 = vmatprep.mubr.f32.mxu0 0.0
    %548 = vmatmul.mubr.f32.gmra.mrb[0].mxu0 %v472
    %v549 = vpop.f32.mrb[0].mxu0
    %v550 = vadd.f32 %v482, %v549
    %v551 = vpop.f32.mrb[0].mxu0
    %552 = vdwg.mxu0
    %vm553 = vcmask 122880
    %554 = vst.msk [vmem:[#allocation9] sm:$0x1] %vm553, %v550
    // Predicated region
    $region42: #{tpu_custom_call.1} parent=1 // pred_check
      _
    $region43: #{tpu_custom_call.1} parent=1 // pred_check_branch
      %556 = sbr.rel (0) target = $region45
    $region44: #{tpu_custom_call.1} parent=1 // pred_region
      %s558 = ssub.s32 16, 16
      %559 = vsyncadd [#allocation5], %s558
      %s561 = sshll.u32 [#allocation9], 4
      %s562 = int_to_ptr.vmem [resolvable:$true] %s561
      %564 = dma.vmem_to_hbm [thread:$0]  %s562, 16, %s7, [#allocation5]
    $region45: #{tpu_custom_call.1} parent=1 // pred_fallthru
      _
    // Predicated region
    $region46: #{tpu_custom_call.1} parent=1 // pred_check
      _
    $region47: #{tpu_custom_call.1} parent=1 // pred_check_branch
      %566 = sbr.rel (0) target = $region49
    $region48: #{tpu_custom_call.1} parent=1 // pred_region
      %567 = dma.done [#allocation5], 16
    $region49: #{tpu_custom_call.1} parent=1 // pred_fallthru
      _
    %568 = vsyncpa [#allocation4], 1
    %569 = vsyncpa [#allocation7], 1
    %570 = vsyncpa [#allocation5], 1

</llo_original>
